<compile_context>
chip_gen: v5e
topology: v5e:2x2
jax: 0.10.0
libtpu: 0.0.40
codegen_flags: <defaults>
</compile_context>

<pallas_src>
import functools

import jax
import jax.numpy as jnp
from jax.experimental import pallas as pl
from jax.experimental.pallas import tpu as pltpu


_SMALL_DIM = 8            # contraction/output dims <= this stay off the MXU (VPU/XLU instead)
_VMEM_BUDGET = 24 << 20   # conservative working-set target: fits v7x's 32 MiB default scope


def _mlp_t_kernel(xT_ref, p_ref, oT_ref, *, n_in, n_hidden, n_out):
    """Batch-on-lanes 2-layer MLP: oT = w2^T · sigmoid(w1^T · xT + b1) + b2.

    xT_ref : (n_in, tile_b)                         input tile, batch on lanes
    p_ref  : (n_hidden, n_in + 1 + n_out + 1)       packed [w1T | b1 | w2 | b2(pad)]
    oT_ref : (n_out, tile_b)                        lane-dense output tile
    """
    # Single packed parameter load (1 DMA instead of 4 tiny ones).  Accumulate in
    # f32 even for bf16 inputs so the VPU fallback matches the MXU path numerically.
    p = p_ref[...].astype(jnp.float32)
    w1T = p[:, 0:n_in]                                      # (n_hidden, n_in)
    b1 = p[:, n_in:n_in + 1]                                # (n_hidden, 1)
    w2 = p[:, n_in + 1:n_in + 1 + n_out]                    # (n_hidden, n_out)
    b2 = p[0:n_out, n_in + 1 + n_out:n_in + 2 + n_out]      # (n_out, 1)

    xT = xT_ref[...].astype(jnp.float32)                    # (n_in, tile_b)

    # ---- hidden layer: hT[j, b] = sum_i w1T[j, i] * xT[i, b] ---------------------
    if n_in <= _SMALL_DIM:
        # tiny contraction: VPU broadcast outer products, no wasted MXU systolic pass
        hT = w1T[:, 0:1] * xT[0:1, :]
        for i in range(1, n_in):
            hT = hT + w1T[:, i:i + 1] * xT[i:i + 1, :]
    else:
        hT = jnp.dot(w1T, xT, preferred_element_type=jnp.float32)

    # sigmoid(z) == 0.5 * (tanh(z/2) + 1): a single EUP transcendental per vreg
    # (exp + divide would push the one saturating EUP slot roughly twice as hard).
    hT = 0.5 * (jnp.tanh(0.5 * (hT + b1)) + 1.0)            # (n_hidden, tile_b), f32

    # ---- output layer: oT[o, b] = sum_k w2[k, o] * hT[k, b] ----------------------
    if n_out <= _SMALL_DIM:
        # tiny output dim: VPU multiply + XLU sublane reduce per output column
        cols = [jnp.sum(hT * w2[:, o:o + 1], axis=0, keepdims=True) for o in range(n_out)]
        oT = cols[0] if n_out == 1 else jnp.concatenate(cols, axis=0)
    else:
        oT = jax.lax.dot_general(w2, hT, (((0,), (0,)), ((), ())),
                                 preferred_element_type=jnp.float32)

    oT_ref[...] = (oT + b2).astype(oT_ref.dtype)


def _vmem_bytes(tile_b, *, n_in, n_hidden, n_out, n_cols, itemsize):
    return (2 * n_in * tile_b * itemsize        # x blocks (double-buffered)
            + 2 * n_out * tile_b * itemsize     # out blocks (double-buffered)
            + n_hidden * n_cols * itemsize      # packed params (resident)
            + n_hidden * tile_b * 4             # f32 hT temporary
            + (2 << 20))                        # working-vreg / compiler slack


def _pick_tile_b(B, est, cap=8192):
    """Small batch -> a single grid step (per-step overhead dominates).  Large
    batch -> largest lane-aligned divisor of B that is <= cap and <= B/2 (so the
    grid has >= 2 steps and both v7x TensorCores get work) and fits VMEM."""
    if B <= 2048 and est(B) <= _VMEM_BUDGET:
        return B
    t = (min(cap, B // 2) // 128) * 128
    while t >= 128:
        if B % t == 0 and est(t) <= _VMEM_BUDGET:
            return t
        t -= 128
    return B  # no lane-aligned divisor: fall back to one correct (if slower) step


def net_forward(x, w1, b1, w2, b2, *, tile_b=None):
    """x:(B, n_in), w1:(n_in, n_hidden), b1:(n_hidden,), w2:(n_hidden, n_out), b2:(n_out,)."""
    B, n_in = x.shape
    n_hidden = w1.shape[1]
    n_out = w2.shape[1]
    n_cols = n_in + 1 + n_out + 1
    itemsize = jnp.dtype(x.dtype).itemsize

    est = functools.partial(_vmem_bytes, n_in=n_in, n_hidden=n_hidden,
                            n_out=n_out, n_cols=n_cols, itemsize=itemsize)
    if tile_b is None:
        tile_b = _pick_tile_b(B, est)
    assert B % tile_b == 0, "batch must be divisible by tile_b"
    if tile_b != B:
        assert tile_b % 128 == 0, "batch tiles must be lane-aligned (multiple of 128)"

    # Packed parameter block: [w1T | b1 | w2 | b2 (zero-padded)] -> one DMA.
    params = jnp.zeros((n_hidden, n_cols), x.dtype)
    params = params.at[:, 0:n_in].set(w1.T.astype(x.dtype))
    params = params.at[:, n_in].set(b1.astype(x.dtype))
    params = params.at[:, n_in + 1:n_in + 1 + n_out].set(w2.astype(x.dtype))
    params = params.at[:n_out, n_in + 1 + n_out].set(b2.astype(x.dtype))

    # Batch-on-lanes layout; for n_in == 1 (this module) the transpose is a cheap
    # reshape.  TODO(synk): for n_in > 1, fold this transpose into the in-kernel
    # contraction (load (tile_b, n_in) blocks) to skip a wrapper HBM pass over x.
    xT = x.T                                                 # (n_in, B)

    grid = (B // tile_b,)
    vmem_limit = int(min(max(est(tile_b) * 2, 16 << 20), 64 << 20))

    kernel = functools.partial(_mlp_t_kernel, n_in=n_in, n_hidden=n_hidden, n_out=n_out)
    oT = pl.pallas_call(
        kernel,
        out_shape=jax.ShapeDtypeStruct((n_out, B), x.dtype),
        grid_spec=pltpu.PrefetchScalarGridSpec(
            num_scalar_prefetch=0,
            grid=grid,
            in_specs=[
                pl.BlockSpec((n_in, tile_b), lambda i: (0, i)),      # x tile, lane-dense
                pl.BlockSpec((n_hidden, n_cols), lambda i: (0, 0)),  # packed params (resident;
                                                                     # tiny, so default 2-deep
                                                                     # buffering is harmless)
            ],
            out_specs=pl.BlockSpec((n_out, tile_b), lambda i: (0, i)),  # lane-dense output
        ),
        compiler_params=pltpu.CompilerParams(
            dimension_semantics=("parallel",),
            vmem_limit_bytes=vmem_limit,
        ),
    )(xT, params)

    return oT.T                                              # back to torch layout (B, n_out)


def init_linear_params(key, fan_in, fan_out, dtype=jnp.float32):
    # Mimic torch.nn.Linear default init: U(-1/sqrt(fan_in), 1/sqrt(fan_in))
    kw, kb = jax.random.split(key)
    bound = 1.0 / jnp.sqrt(jnp.asarray(fan_in, dtype))
    w = jax.random.uniform(kw, (fan_in, fan_out), dtype, -bound, bound)
    b = jax.random.uniform(kb, (fan_out,), dtype, -bound, bound)
    return w, b


if __name__ == "__main__":
    # Net(n_input=1, n_hidden=32, n_output=1), small batch consistent with the module
    n_input, n_hidden, n_output = 1, 32, 1
    batch = 256

    key = jax.random.PRNGKey(0)
    k1, k2 = jax.random.split(key)
    w1, b1 = init_linear_params(k1, n_input, n_hidden)
    w2, b2 = init_linear_params(k2, n_hidden, n_output)

    # input like torch.unsqueeze(torch.linspace(-1, 1, N), dim=1) -> (N, 1)
    x = jnp.linspace(-1.0, 1.0, batch, dtype=jnp.float32).reshape(batch, 1)

    out = jax.block_until_ready(net_forward(x, w1, b1, w2, b2))

    # plain-JAX reference (module semantics)
    ref = jax.nn.sigmoid(x @ w1 + b1) @ w2 + b2
    assert out.shape == (batch, n_output)
    assert jnp.allclose(out, ref, atol=1e-5, rtol=1e-5), "mismatch vs reference"

    print("KERNEL_OK")
</pallas_src>

<mosaic_0001>
module attributes {stable_mosaic.version = 11 : i64} {
  func.func @_mlp_t_kernel(%arg0: i32, %arg1: memref<1x256xf32, #tpu.memory_space<vmem>>, %arg2: memref<32x4xf32, #tpu.memory_space<vmem>>, %arg3: memref<1x256xf32, #tpu.memory_space<vmem>>) attributes {dimension_semantics = [#tpu.dimension_semantics<parallel>], iteration_bounds = array<i64: 1>, scalar_prefetch = 0 : i64, scratch_operands = 0 : i64, tpu.core_type = #tpu.core_type<tc>, window_params = [{transform_indices = @transform_0, window_bounds = array<i64: 1, 256>}, {pipeline_mode = #tpu.pipeline_mode<synchronous>, transform_indices = @transform_1, window_bounds = array<i64: 32, 4>}, {transform_indices = @transform_2, window_bounds = array<i64: 1, 256>}]} {
    %c0 = arith.constant 0 : index
    %c0_0 = arith.constant 0 : index
    %0 = vector.load %arg2[%c0, %c0_0] : memref<32x4xf32, #tpu.memory_space<vmem>>, vector<32x4xf32>
    %1 = vector.extract_strided_slice %0 {offsets = [0, 0], sizes = [32, 1], strides = [1, 1]} : vector<32x4xf32> to vector<32x1xf32>
    %2 = vector.extract_strided_slice %0 {offsets = [0, 1], sizes = [32, 1], strides = [1, 1]} : vector<32x4xf32> to vector<32x1xf32>
    %3 = vector.extract_strided_slice %0 {offsets = [0, 2], sizes = [32, 1], strides = [1, 1]} : vector<32x4xf32> to vector<32x1xf32>
    %4 = vector.extract_strided_slice %0 {offsets = [0, 3], sizes = [1, 1], strides = [1, 1]} : vector<32x4xf32> to vector<1x1xf32>
    %c0_1 = arith.constant 0 : index
    %c0_2 = arith.constant 0 : index
    %5 = vector.load %arg1[%c0_1, %c0_2] : memref<1x256xf32, #tpu.memory_space<vmem>>, vector<1x256xf32>
    %6 = vector.broadcast %1 : vector<32x1xf32> to vector<32x256xf32>
    %7 = vector.broadcast %5 : vector<1x256xf32> to vector<32x256xf32>
    %8 = arith.mulf %6, %7 : vector<32x256xf32>
    %9 = vector.broadcast %2 : vector<32x1xf32> to vector<32x256xf32>
    %10 = arith.addf %8, %9 : vector<32x256xf32>
    %cst = arith.constant 5.000000e-01 : f32
    %11 = vector.broadcast %cst : f32 to vector<32x256xf32>
    %12 = arith.mulf %11, %10 : vector<32x256xf32>
    %13 = math.tanh %12 : vector<32x256xf32>
    %cst_3 = arith.constant 1.000000e+00 : f32
    %14 = vector.broadcast %cst_3 : f32 to vector<32x256xf32>
    %15 = arith.addf %13, %14 : vector<32x256xf32>
    %cst_4 = arith.constant 5.000000e-01 : f32
    %16 = vector.broadcast %cst_4 : f32 to vector<32x256xf32>
    %17 = arith.mulf %16, %15 : vector<32x256xf32>
    %18 = vector.broadcast %3 : vector<32x1xf32> to vector<32x256xf32>
    %19 = arith.mulf %17, %18 : vector<32x256xf32>
    %cst_5 = arith.constant dense<0.000000e+00> : vector<256xf32>
    %20 = vector.multi_reduction <add>, %19, %cst_5 [0] : vector<32x256xf32> to vector<256xf32>
    %21 = vector.shape_cast %20 : vector<256xf32> to vector<1x256xf32>
    %22 = vector.broadcast %4 : vector<1x1xf32> to vector<1x256xf32>
    %23 = arith.addf %21, %22 : vector<1x256xf32>
    %c0_6 = arith.constant 0 : index
    %c0_7 = arith.constant 0 : index
    %24 = vector.load %arg3[%c0_6, %c0_7] : memref<1x256xf32, #tpu.memory_space<vmem>>, vector<1x256xf32>
    tpu.vector_store %arg3[%c0_6, %c0_7], %23 {strides = array<i32>} : memref<1x256xf32, #tpu.memory_space<vmem>>, vector<1x256xf32>,
    return
  }
  func.func @transform_0(%arg0: i32) -> (i32, i32) {
    %c0_i32 = arith.constant 0 : i32
    %c0_i32_0 = arith.constant 0 : i32
    return %c0_i32, %arg0 : i32, i32
  }
  func.func @transform_1(%arg0: i32) -> (i32, i32) {
    %c0_i32 = arith.constant 0 : i32
    %c0_i32_0 = arith.constant 0 : i32
    %c0_i32_1 = arith.constant 0 : i32
    return %c0_i32, %c0_i32_0 : i32, i32
  }
  func.func @transform_2(%arg0: i32) -> (i32, i32) {
    %c0_i32 = arith.constant 0 : i32
    %c0_i32_0 = arith.constant 0 : i32
    return %c0_i32, %arg0 : i32, i32
  }
}

</mosaic_0001>

<llo_original>
// kernel: tpu_custom_call.1
$region0: #{tpu_custom_call.1}
  #allocation0 [shape = 'u32[]', space=smem, size = 0x4, offset = 0x4, fixed_abs, tag = 'smem constant byte address 0x4 - core index']
  #allocation1 [shape = 'u32[72,128]{1,0:T(1,128)}', space=vmem, size = 0x9000, scoped, tag = 'internal scratch']
  %s0 = inlined_call_operand.vmem [shape: f32[1,256], index: 0, kind: input, shape index: {}]
  %s1 = inlined_call_operand.vmem [shape: f32[32,4], index: 1, kind: input, shape index: {}]
  %s2 = inlined_call_operand.hbm [shape: f32[1,256], index: 2, kind: output, shape index: {}]
  %s3 = sld [smem:[#allocation0]]
  $region18: #{tpu_custom_call.1} parent=0
    _
  %s5 = ssub.s32 1, %s3
  %s6 = scalar_select 0, %s5, %s3
  $region1: #{tpu_custom_call.1} parent=0
    #allocation2 [shape = 'u8[1024]{0}', space=vmem, size = 0x400, scoped, tag = 'output window, operand 0, single buffered']
    #allocation3 [shape = 's32[1]{0}', space=sflag, size = 0x4, scoped, tag = 'scoped memory for tpu_custom_call.1']
    %7 = vsyncpa [#allocation3], 0
    // Predicated region
    $region2: #{tpu_custom_call.1} parent=1 // pred_check
      _
    $region3: #{tpu_custom_call.1} parent=1 // pred_check_branch
      %9 = sbr.rel (0) target = $region5
    $region4: #{tpu_custom_call.1} parent=1 // pred_region
      _
    $region5: #{tpu_custom_call.1} parent=1 // pred_fallthru
      _
    // Predicated region
    $region6: #{tpu_custom_call.1} parent=1 // pred_check
      _
    $region7: #{tpu_custom_call.1} parent=1 // pred_check_branch
      %11 = sbr.rel (0) target = $region9
    $region8: #{tpu_custom_call.1} parent=1 // pred_region
      _
    $region9: #{tpu_custom_call.1} parent=1 // pred_fallthru
      _
    %v12 = vld [vmem:[%s1] sm:$0xff]
    %v13 = vld [vmem:[%s1 + $0x8] sm:$0xff]
    %v14 = vld [vmem:[%s1 + $0x10] sm:$0xff]
    %v15 = vld [vmem:[%s1 + $0x18] sm:$0xff]
    %v16 = vld [vmem:[%s0] sm:$0x3]
    %18 = vset.pattern.permute.xlu0 0
    %19 = vperm.xlu0 %18, %v12
    %v20 = vpop.permute.xlu0 %19
    %23 = vset.pattern.permute.xlu0 0
    %24 = vperm.xlu0 %23, %v13
    %v25 = vpop.permute.xlu0 %24
    %28 = vset.pattern.permute.xlu0 0
    %29 = vperm.xlu0 %28, %v14
    %v30 = vpop.permute.xlu0 %29
    %33 = vset.pattern.permute.xlu0 0
    %34 = vperm.xlu0 %33, %v15
    %v35 = vpop.permute.xlu0 %34
    %v38 = vperm.slane %v16, 0
    %v39 = vperm.slane %v16, 1
    %v42 = vmul.f32 %v20, %v38
    %v43 = vmul.f32 %v20, %v39
    %v44 = vmul.f32 %v25, %v38
    %v45 = vmul.f32 %v25, %v39
    %v46 = vmul.f32 %v30, %v38
    %v47 = vmul.f32 %v30, %v39
    %v48 = vmul.f32 %v35, %v38
    %v49 = vmul.f32 %v35, %v39
    %50 = vset.pattern.permute.xlu0 1
    %51 = vperm.xlu0 %50, %v12
    %v52 = vpop.permute.xlu0 %51
    %54 = vset.pattern.permute.xlu0 1
    %55 = vperm.xlu0 %54, %v13
    %v56 = vpop.permute.xlu0 %55
    %58 = vset.pattern.permute.xlu0 1
    %59 = vperm.xlu0 %58, %v14
    %v60 = vpop.permute.xlu0 %59
    %62 = vset.pattern.permute.xlu0 1
    %63 = vperm.xlu0 %62, %v15
    %v64 = vpop.permute.xlu0 %63
    %v66 = vadd.f32 %v42, %v52
    %v67 = vadd.f32 %v43, %v52
    %v68 = vadd.f32 %v44, %v56
    %v69 = vadd.f32 %v45, %v56
    %v70 = vadd.f32 %v46, %v60
    %v71 = vadd.f32 %v47, %v60
    %v72 = vadd.f32 %v48, %v64
    %v73 = vadd.f32 %v49, %v64
    %v74 = vmul.f32 %v66, 0.5
    %v75 = vmul.f32 %v67, 0.5
    %v76 = vmul.f32 %v68, 0.5
    %v77 = vmul.f32 %v69, 0.5
    %v78 = vmul.f32 %v70, 0.5
    %v79 = vmul.f32 %v71, 0.5
    %v80 = vmul.f32 %v72, 0.5
    %v81 = vmul.f32 %v73, 0.5
    %v82 = vtanh.pop %v74
    %v83 = vtanh.pop %v75
    %v84 = vtanh.pop %v76
    %v85 = vtanh.pop %v77
    %v86 = vtanh.pop %v78
    %v87 = vtanh.pop %v79
    %v88 = vtanh.pop %v80
    %v89 = vtanh.pop %v81
    %v90 = vadd.f32 %v82, 1.0
    %v91 = vadd.f32 %v83, 1.0
    %v92 = vadd.f32 %v84, 1.0
    %v93 = vadd.f32 %v85, 1.0
    %v94 = vadd.f32 %v86, 1.0
    %v95 = vadd.f32 %v87, 1.0
    %v96 = vadd.f32 %v88, 1.0
    %v97 = vadd.f32 %v89, 1.0
    %v98 = vmul.f32 %v90, 0.5
    %v99 = vmul.f32 %v91, 0.5
    %v100 = vmul.f32 %v92, 0.5
    %v101 = vmul.f32 %v93, 0.5
    %v102 = vmul.f32 %v94, 0.5
    %v103 = vmul.f32 %v95, 0.5
    %v104 = vmul.f32 %v96, 0.5
    %v105 = vmul.f32 %v97, 0.5
    %106 = vset.pattern.permute.xlu0 2
    %107 = vperm.xlu0 %106, %v12
    %v108 = vpop.permute.xlu0 %107
    %110 = vset.pattern.permute.xlu0 2
    %111 = vperm.xlu0 %110, %v13
    %v112 = vpop.permute.xlu0 %111
    %114 = vset.pattern.permute.xlu0 2
    %115 = vperm.xlu0 %114, %v14
    %v116 = vpop.permute.xlu0 %115
    %118 = vset.pattern.permute.xlu0 2
    %119 = vperm.xlu0 %118, %v15
    %v120 = vpop.permute.xlu0 %119
    %v122 = vmul.f32 %v98, %v108
    %v123 = vmul.f32 %v99, %v108
    %v124 = vmul.f32 %v100, %v112
    %v125 = vmul.f32 %v101, %v112
    %v126 = vmul.f32 %v102, %v116
    %v127 = vmul.f32 %v103, %v116
    %v128 = vmul.f32 %v104, %v120
    %v129 = vmul.f32 %v105, %v120
    %v130 = vadd.f32 %v122, %v124
    %v131 = vadd.f32 %v130, %v126
    %v132 = vadd.f32 %v131, %v128
    %v133 = vrot.slane %v132, 4
    %v134 = vadd.f32 %v132, %v133
    %v135 = vrot.slane %v134, 2
    %v136 = vadd.f32 %v134, %v135
    %v137 = vrot.slane %v136, 1
    %v138 = vadd.f32 %v136, %v137
    %v139 = vadd.f32 %v123, %v125
    %v140 = vadd.f32 %v139, %v127
    %v141 = vadd.f32 %v140, %v129
    %v142 = vrot.slane %v141, 4
    %v143 = vadd.f32 %v141, %v142
    %v144 = vrot.slane %v143, 2
    %v145 = vadd.f32 %v143, %v144
    %v146 = vrot.slane %v145, 1
    %v147 = vadd.f32 %v145, %v146
    %148 = vset.pattern.permute.xlu0 3
    %149 = vperm.xlu0 %148, %v12
    %v150 = vpop.permute.xlu0 %149
    %v152 = vadd.f32 %v138, %v150
    %v153 = vadd.f32 %v147, %v150
    %v156 = vrot.slane %v153, 7
    %vm157 = vcmask 1040384
    %v158 = vsel %vm157, %v152, %v156
    %v160 = vlaneseq
    %vm161 = vcmp.ge.s32.totalorder %v160, 0
    %vm162 = vcmp.lt.s32.totalorder %v160, 256
    %vm163 = vmand %vm161, %vm162
    %164 = vst.msk [vmem:[#allocation2] sm:$0x3] %vm163, %v158
    // Predicated region
    $region10: #{tpu_custom_call.1} parent=1 // pred_check
      _
    $region11: #{tpu_custom_call.1} parent=1 // pred_check_branch
      %166 = sbr.rel (0) target = $region13
    $region12: #{tpu_custom_call.1} parent=1 // pred_region
      %168 = vsyncadd [#allocation3], 0
      %s170 = sshll.u32 [#allocation2], 4
      %s171 = int_to_ptr.vmem [resolvable:$true] %s170
      %s172 = sshll.u32 %s2, 4
      %s173 = int_to_ptr.hbm [resolvable:$true] %s172
      %175 = dma.vmem_to_hbm [thread:$0]  %s171, 32, %s173, [#allocation3]
    $region13: #{tpu_custom_call.1} parent=1 // pred_fallthru
      _
    // Predicated region
    $region14: #{tpu_custom_call.1} parent=1 // pred_check
      _
    $region15: #{tpu_custom_call.1} parent=1 // pred_check_branch
      %177 = sbr.rel (0) target = $region17
    $region16: #{tpu_custom_call.1} parent=1 // pred_region
      %179 = dma.done [#allocation3], 32
    $region17: #{tpu_custom_call.1} parent=1 // pred_fallthru
      _
    %180 = vsyncpa [#allocation3], 1

</llo_original>
